<compile_context>
chip_gen: v6e
topology: v6e:2x2x1
jax: 0.10.0
libtpu: 0.0.40
codegen_flags: <defaults>
</compile_context>

<pallas_src>
import functools

import jax
import jax.numpy as jnp
from jax import lax
from jax.experimental import pallas as pl
from jax.experimental.pallas import tpu as pltpu

H1 = 64   # fc1 out features
H2 = 32   # fc2 out features
H3 = 1    # fc3 out features


def _cdiv(a, b):
    return (a + b - 1) // b


def _round_up(n, m):
    return ((n + m - 1) // m) * m


def _mlp_kernel(x_ref, w1_ref, w2_ref, w3_ref, b_ref, out_ref):
    """Fused MLP on one batch tile, computed with batch on the lane axis.

    x_ref  : (TM, F)   -- streamed x tile in its native (batch, feature) layout
    w1_ref : (64, F)   -- PyTorch layout (out, in), resident in VMEM
    w2_ref : (32, 64)
    w3_ref : (1, 32)
    b_ref  : (97, 1)   -- [b1; b2; b3] as a column, resident
    out_ref: (1, TM)   -- lane-dense output slab
    """
    x = x_ref[...]                              # (TM, F)

    b1 = b_ref[0:H1, :]                         # (64, 1)
    b2 = b_ref[H1:H1 + H2, :]                   # (32, 1)
    b3 = b_ref[H1 + H2:H1 + H2 + H3, :]         # (1, 1)

    # (64, F) contracted with (TM, F) on dim 1 -> (64, TM): the orientation
    # swap happens here (XLU/Mosaic handles the small-K transposed operand),
    # no wrapper-side transpose of x needed.
    h1 = lax.dot_general(w1_ref[...], x, (((1,), (1,)), ((), ())),
                         preferred_element_type=jnp.float32)
    h1 = jnp.maximum(h1 + b1, 0.0)              # (64, TM)

    h2 = jnp.dot(w2_ref[...], h1, preferred_element_type=jnp.float32)
    h2 = jnp.maximum(h2 + b2, 0.0)              # (32, TM)

    h3 = jnp.dot(w3_ref[...], h2, preferred_element_type=jnp.float32) + b3
    out_ref[...] = h3.astype(out_ref.dtype)     # (1, TM), fully lane-dense store


@functools.partial(jax.jit, static_argnames=("tm_cap", "min_tiles"))
def diamond_price_predictor(x, w1, b1, w2, b2, w3, b3, *, tm_cap=16384, min_tiles=2):
    """Pallas-backed forward pass of DiamondPricePredictor.

    x : (B, F) float32
    w1: (64, F)  b1: (64,)      -- PyTorch nn.Linear layout (out, in)
    w2: (32, 64) b2: (32,)
    w3: (1, 32)  b3: (1,)
    returns (B, 1) float32
    """
    B, F = x.shape
    x = x.astype(jnp.float32)

    # Tiny batches: pad rows up to one full 128-lane tile (cheap, avoids a
    # block larger than the array).  Batches >= 128 are streamed with NO
    # host-side copy: the last grid step may read past B (garbage rows) but
    # those columns are dropped by the final slice, and out-of-range output
    # writes are masked by Pallas.
    B_work = max(B, 128)
    if B_work != B:
        x = jnp.pad(x, ((0, B_work - B), (0, 0)))

    # Derive TM from B: at least `min_tiles` tiles (keeps both v7x TCs busy),
    # each a multiple of 128 lanes, capped by tm_cap.
    n_tiles = max(min_tiles, _cdiv(B_work, tm_cap))
    TM = min(_round_up(_cdiv(B_work, n_tiles), 128), _round_up(B_work, 128))
    grid = (_cdiv(B_work, TM),)

    w1 = w1.astype(jnp.float32)
    w2 = w2.astype(jnp.float32)
    w3 = w3.astype(jnp.float32)

    # One consolidated bias column: [b1; b2; b3] -> (97, 1), one resident DMA.
    bias_col = jnp.concatenate(
        [b1.reshape(-1), b2.reshape(-1), b3.reshape(-1)]
    ).astype(jnp.float32).reshape(-1, 1)

    resident = lambda shape: pl.BlockSpec(shape, lambda i: (0, 0))

    # VMEM budget per batch row (f32, lane/sublane padding included):
    #   x double-buffer ~2*512 B, h1 256 B, h2 128 B, out double-buffer 64 B,
    # plus slack for Mosaic temporaries and the tiny resident weights.
    est = 1600 * TM + (4 << 20)
    vmem_limit = int(max(est + (8 << 20), 16 << 20))

    out_t = pl.pallas_call(
        _mlp_kernel,
        out_shape=jax.ShapeDtypeStruct((1, B_work), jnp.float32),
        grid=grid,
        in_specs=[
            pl.BlockSpec((TM, F), lambda i: (i, 0)),   # x tile, streamed
            resident(w1.shape),                        # weights stay in VMEM
            resident(w2.shape),
            resident(w3.shape),
            resident(bias_col.shape),                  # fused biases
        ],
        out_specs=pl.BlockSpec((1, TM), lambda i: (0, i)),
        compiler_params=pltpu.CompilerParams(
            dimension_semantics=("parallel",),         # megacore-shardable on v7x
            vmem_limit_bytes=vmem_limit),
    )(x, w1, w2, w3, bias_col)

    # Drop padding, return in the module's (B, 1) layout.
    return out_t[0, :B].reshape(B, 1)


def init_params(key, input_size):
    """Deterministic init mirroring nn.Linear's U(-1/sqrt(fan_in), 1/sqrt(fan_in)).

    Weights are kept in PyTorch layout (out_features, in_features).
    """
    def linear(key, fan_in, fan_out):
        kw, kb = jax.random.split(key)
        bound = 1.0 / jnp.sqrt(jnp.float32(fan_in))
        w = jax.random.uniform(kw, (fan_out, fan_in), jnp.float32, -bound, bound)
        b = jax.random.uniform(kb, (fan_out,), jnp.float32, -bound, bound)
        return w, b

    k1, k2, k3 = jax.random.split(key, 3)
    w1, b1 = linear(k1, input_size, H1)
    w2, b2 = linear(k2, H1, H2)
    w3, b3 = linear(k3, H2, H3)
    return w1, b1, w2, b2, w3, b3


def reference_forward(x, w1, b1, w2, b2, w3, b3):
    h = jnp.maximum(x @ w1.T + b1, 0.0)
    h = jnp.maximum(h @ w2.T + b2, 0.0)
    return h @ w3.T + b3


if __name__ == "__main__":
    key = jax.random.PRNGKey(0)
    k_x, k_p = jax.random.split(key)

    input_size = 9   # typical diamond feature count (carat, cut, color, ...)
    params = init_params(k_p, input_size)

    def check(batch, **kw):
        xb = jax.random.normal(jax.random.fold_in(k_x, batch),
                               (batch, input_size), jnp.float32)
        out = jax.block_until_ready(diamond_price_predictor(xb, *params, **kw))
        ref = reference_forward(xb, *params)
        assert out.shape == (batch, 1), out.shape
        err = jnp.max(jnp.abs(out - ref))
        assert jnp.allclose(out, ref, atol=1e-3, rtol=1e-3), (
            f"batch={batch}: max abs err {err}")

    check(8)                 # tiny batch -> padded to a single 128-lane tile
    check(300)               # 2 grid steps, partial (non-dividing) last block
    check(640, tm_cap=128)   # many full tiles, exercises resident-weight path

    print("KERNEL_OK")
</pallas_src>

<mosaic_0001>
module attributes {stable_mosaic.version = 11 : i64} {
  func.func @_mlp_kernel(%arg0: i32, %arg1: memref<128x9xf32, #tpu.memory_space<vmem>>, %arg2: memref<64x9xf32, #tpu.memory_space<vmem>>, %arg3: memref<32x64xf32, #tpu.memory_space<vmem>>, %arg4: memref<1x32xf32, #tpu.memory_space<vmem>>, %arg5: memref<97x1xf32, #tpu.memory_space<vmem>>, %arg6: memref<1x128xf32, #tpu.memory_space<vmem>>) attributes {dimension_semantics = [#tpu.dimension_semantics<parallel>], iteration_bounds = array<i64: 1>, scalar_prefetch = 0 : i64, scratch_operands = 0 : i64, tpu.core_type = #tpu.core_type<tc>, window_params = [{transform_indices = @transform_0, window_bounds = array<i64: 128, 9>}, {pipeline_mode = #tpu.pipeline_mode<synchronous>, transform_indices = @transform_1, window_bounds = array<i64: 64, 9>}, {pipeline_mode = #tpu.pipeline_mode<synchronous>, transform_indices = @transform_2, window_bounds = array<i64: 32, 64>}, {pipeline_mode = #tpu.pipeline_mode<synchronous>, transform_indices = @transform_3, window_bounds = array<i64: 1, 32>}, {pipeline_mode = #tpu.pipeline_mode<synchronous>, transform_indices = @transform_4, window_bounds = array<i64: 97, 1>}, {transform_indices = @transform_5, window_bounds = array<i64: 1, 128>}]} {
    %c0 = arith.constant 0 : index
    %c0_0 = arith.constant 0 : index
    %0 = vector.load %arg1[%c0, %c0_0] : memref<128x9xf32, #tpu.memory_space<vmem>>, vector<128x9xf32>
    %c0_1 = arith.constant 0 : index
    %c0_2 = arith.constant 0 : index
    %1 = vector.load %arg5[%c0_1, %c0_2] : memref<97x1xf32, #tpu.memory_space<vmem>>, vector<64x1xf32>
    %c64 = arith.constant 64 : index
    %c0_3 = arith.constant 0 : index
    %2 = vector.load %arg5[%c64, %c0_3] : memref<97x1xf32, #tpu.memory_space<vmem>>, vector<32x1xf32>
    %c96 = arith.constant 96 : index
    %c0_4 = arith.constant 0 : index
    %3 = vector.load %arg5[%c96, %c0_4] : memref<97x1xf32, #tpu.memory_space<vmem>>, vector<1x1xf32>
    %c0_5 = arith.constant 0 : index
    %c0_6 = arith.constant 0 : index
    %4 = vector.load %arg2[%c0_5, %c0_6] : memref<64x9xf32, #tpu.memory_space<vmem>>, vector<64x9xf32>
    %cst = arith.constant dense<0.000000e+00> : vector<64x128xf32>
    %5 = tpu.matmul %4, %0, %cst {dimension_numbers = #tpu.dot_dimension_numbers<[1], [1], [0], [0], [0, 0, 1, 0], [], []>} : vector<64x9xf32>, vector<128x9xf32>, vector<64x128xf32> -> vector<64x128xf32>
    %6 = vector.broadcast %1 : vector<64x1xf32> to vector<64x128xf32>
    %7 = arith.addf %5, %6 : vector<64x128xf32>
    %cst_7 = arith.constant 0.000000e+00 : f32
    %8 = vector.broadcast %cst_7 : f32 to vector<64x128xf32>
    %9 = arith.maximumf %7, %8 : vector<64x128xf32>
    %c0_8 = arith.constant 0 : index
    %c0_9 = arith.constant 0 : index
    %10 = vector.load %arg3[%c0_8, %c0_9] : memref<32x64xf32, #tpu.memory_space<vmem>>, vector<32x64xf32>
    %cst_10 = arith.constant dense<0.000000e+00> : vector<32x128xf32>
    %11 = tpu.matmul %10, %9, %cst_10 {dimension_numbers = #tpu.dot_dimension_numbers<[1], [0], [0], [1], [0, 0, 1, 1], [], []>} : vector<32x64xf32>, vector<64x128xf32>, vector<32x128xf32> -> vector<32x128xf32>
    %12 = vector.broadcast %2 : vector<32x1xf32> to vector<32x128xf32>
    %13 = arith.addf %11, %12 : vector<32x128xf32>
    %cst_11 = arith.constant 0.000000e+00 : f32
    %14 = vector.broadcast %cst_11 : f32 to vector<32x128xf32>
    %15 = arith.maximumf %13, %14 : vector<32x128xf32>
    %c0_12 = arith.constant 0 : index
    %c0_13 = arith.constant 0 : index
    %16 = vector.load %arg4[%c0_12, %c0_13] : memref<1x32xf32, #tpu.memory_space<vmem>>, vector<1x32xf32>
    %cst_14 = arith.constant dense<0.000000e+00> : vector<1x128xf32>
    %17 = tpu.matmul %16, %15, %cst_14 {dimension_numbers = #tpu.dot_dimension_numbers<[1], [0], [0], [1], [0, 0, 1, 1], [], []>} : vector<1x32xf32>, vector<32x128xf32>, vector<1x128xf32> -> vector<1x128xf32>
    %18 = vector.broadcast %3 : vector<1x1xf32> to vector<1x128xf32>
    %19 = arith.addf %17, %18 : vector<1x128xf32>
    %c0_15 = arith.constant 0 : index
    %c0_16 = arith.constant 0 : index
    %20 = vector.load %arg6[%c0_15, %c0_16] : memref<1x128xf32, #tpu.memory_space<vmem>>, vector<1x128xf32>
    tpu.vector_store %arg6[%c0_15, %c0_16], %19 {strides = array<i32>} : memref<1x128xf32, #tpu.memory_space<vmem>>, vector<1x128xf32>,
    return
  }
  func.func @transform_0(%arg0: i32) -> (i32, i32) {
    %c0_i32 = arith.constant 0 : i32
    %c0_i32_0 = arith.constant 0 : i32
    return %arg0, %c0_i32 : i32, i32
  }
  func.func @transform_1(%arg0: i32) -> (i32, i32) {
    %c0_i32 = arith.constant 0 : i32
    %c0_i32_0 = arith.constant 0 : i32
    %c0_i32_1 = arith.constant 0 : i32
    return %c0_i32, %c0_i32_0 : i32, i32
  }
  func.func @transform_2(%arg0: i32) -> (i32, i32) {
    %c0_i32 = arith.constant 0 : i32
    %c0_i32_0 = arith.constant 0 : i32
    %c0_i32_1 = arith.constant 0 : i32
    return %c0_i32, %c0_i32_0 : i32, i32
  }
  func.func @transform_3(%arg0: i32) -> (i32, i32) {
    %c0_i32 = arith.constant 0 : i32
    %c0_i32_0 = arith.constant 0 : i32
    %c0_i32_1 = arith.constant 0 : i32
    return %c0_i32, %c0_i32_0 : i32, i32
  }
  func.func @transform_4(%arg0: i32) -> (i32, i32) {
    %c0_i32 = arith.constant 0 : i32
    %c0_i32_0 = arith.constant 0 : i32
    %c0_i32_1 = arith.constant 0 : i32
    return %c0_i32, %c0_i32_0 : i32, i32
  }
  func.func @transform_5(%arg0: i32) -> (i32, i32) {
    %c0_i32 = arith.constant 0 : i32
    %c0_i32_0 = arith.constant 0 : i32
    return %c0_i32, %arg0 : i32, i32
  }
}

</mosaic_0001>

<llo_original>
// kernel: diamond_price_predictor.1
$region0: #{diamond_price_predictor.1}
  #allocation0 [shape = 'u32[]', space=smem, size = 0x4, offset = 0x4, fixed_abs, tag = 'smem constant byte address 0x4 - core index']
  #allocation1 [shape = 'u32[144,128]{1,0:T(1,128)}', space=vmem, size = 0x12000, scoped, tag = 'internal scratch']
  %s0 = inlined_call_operand.vmem [shape: f32[128,9], index: 0, kind: input, shape index: {}]
  %s1 = inlined_call_operand.vmem [shape: f32[64,9], index: 1, kind: input, shape index: {}]
  %s2 = inlined_call_operand.vmem [shape: f32[32,64], index: 2, kind: input, shape index: {}]
  %s3 = inlined_call_operand.vmem [shape: f32[1,32], index: 3, kind: input, shape index: {}]
  %s4 = inlined_call_operand.vmem [shape: f32[97,1], index: 4, kind: input, shape index: {}]
  %s5 = inlined_call_operand.vmem [shape: f32[1,128], index: 5, kind: output, shape index: {}]
  %s6 = sld [smem:[#allocation0]]
  $region30: #{diamond_price_predictor.1} parent=0
    _
  %s8 = ssub.s32 1, %s6
  %s9 = scalar_select 0, %s8, %s6
  // Predicated region
  $region2: #{diamond_price_predictor.1} parent=0 // pred_check
    _
  $region3: #{diamond_price_predictor.1} parent=0 // pred_check_branch
    %11 = sbr.rel (0) target = $region5
  $region4: #{diamond_price_predictor.1} parent=0 // pred_region
    _
  $region5: #{diamond_price_predictor.1} parent=0 // pred_fallthru
    _
  // Predicated region
  $region6: #{diamond_price_predictor.1} parent=0 // pred_check
    _
  $region7: #{diamond_price_predictor.1} parent=0 // pred_check_branch
    %13 = sbr.rel (0) target = $region9
  $region8: #{diamond_price_predictor.1} parent=0 // pred_region
    _
  $region9: #{diamond_price_predictor.1} parent=0 // pred_fallthru
    _
  // Predicated region
  $region10: #{diamond_price_predictor.1} parent=0 // pred_check
    _
  $region11: #{diamond_price_predictor.1} parent=0 // pred_check_branch
    %15 = sbr.rel (0) target = $region13
  $region12: #{diamond_price_predictor.1} parent=0 // pred_region
    _
  $region13: #{diamond_price_predictor.1} parent=0 // pred_fallthru
    _
  // Predicated region
  $region14: #{diamond_price_predictor.1} parent=0 // pred_check
    _
  $region15: #{diamond_price_predictor.1} parent=0 // pred_check_branch
    %17 = sbr.rel (0) target = $region17
  $region16: #{diamond_price_predictor.1} parent=0 // pred_region
    _
  $region17: #{diamond_price_predictor.1} parent=0 // pred_fallthru
    _
  // Predicated region
  $region18: #{diamond_price_predictor.1} parent=0 // pred_check
    _
  $region19: #{diamond_price_predictor.1} parent=0 // pred_check_branch
    %19 = sbr.rel (0) target = $region21
  $region20: #{diamond_price_predictor.1} parent=0 // pred_region
    _
  $region21: #{diamond_price_predictor.1} parent=0 // pred_fallthru
    _
  %v20 = vld [vmem:[%s0] sm:$0xff]
  %v21 = vld [vmem:[%s0 + $0x8] sm:$0xff]
  %v22 = vld [vmem:[%s0 + $0x10] sm:$0xff]
  %v23 = vld [vmem:[%s0 + $0x18] sm:$0xff]
  %v24 = vld [vmem:[%s0 + $0x20] sm:$0xff]
  %v25 = vld [vmem:[%s0 + $0x28] sm:$0xff]
  %v26 = vld [vmem:[%s0 + $0x30] sm:$0xff]
  %v27 = vld [vmem:[%s0 + $0x38] sm:$0xff]
  %v28 = vld [vmem:[%s0 + $0x40] sm:$0xff]
  %v29 = vld [vmem:[%s0 + $0x48] sm:$0xff]
  %v30 = vld [vmem:[%s0 + $0x50] sm:$0xff]
  %v31 = vld [vmem:[%s0 + $0x58] sm:$0xff]
  %v32 = vld [vmem:[%s0 + $0x60] sm:$0xff]
  %v33 = vld [vmem:[%s0 + $0x68] sm:$0xff]
  %v34 = vld [vmem:[%s0 + $0x70] sm:$0xff]
  %v35 = vld [vmem:[%s0 + $0x78] sm:$0xff]
  %v36 = vld [vmem:[%s4] sm:$0xff]
  %v37 = vld [vmem:[%s4 + $0x8] sm:$0xff]
  %v38 = vld [vmem:[%s4 + $0x10] sm:$0xff]
  %v39 = vld [vmem:[%s4 + $0x18] sm:$0xff]
  %v40 = vld [vmem:[%s4 + $0x20] sm:$0xff]
  %v41 = vld [vmem:[%s4 + $0x28] sm:$0xff]
  %v42 = vld [vmem:[%s4 + $0x30] sm:$0xff]
  %v43 = vld [vmem:[%s4 + $0x38] sm:$0xff]
  %v44 = vld [vmem:[%s4 + $0x40] sm:$0xff]
  %v45 = vld [vmem:[%s4 + $0x48] sm:$0xff]
  %v46 = vld [vmem:[%s4 + $0x50] sm:$0xff]
  %v47 = vld [vmem:[%s4 + $0x58] sm:$0xff]
  %v48 = vld [vmem:[%s4 + $0x60] sm:$0x1]
  %v49 = vld [vmem:[%s1] sm:$0xff]
  %v50 = vld [vmem:[%s1 + $0x8] sm:$0xff]
  %v51 = vld [vmem:[%s1 + $0x10] sm:$0xff]
  %v52 = vld [vmem:[%s1 + $0x18] sm:$0xff]
  %v53 = vld [vmem:[%s1 + $0x20] sm:$0xff]
  %v54 = vld [vmem:[%s1 + $0x28] sm:$0xff]
  %v55 = vld [vmem:[%s1 + $0x30] sm:$0xff]
  %v56 = vld [vmem:[%s1 + $0x38] sm:$0xff]
  %58 = vset.pattern.permute.xlu0 0
  %59 = vperm.xlu0 %58, %v36
  %v60 = vpop.permute.xlu0 %59
  %63 = vset.pattern.permute.xlu0 0
  %64 = vperm.xlu0 %63, %v37
  %v65 = vpop.permute.xlu0 %64
  %68 = vset.pattern.permute.xlu0 0
  %69 = vperm.xlu0 %68, %v38
  %v70 = vpop.permute.xlu0 %69
  %73 = vset.pattern.permute.xlu0 0
  %74 = vperm.xlu0 %73, %v39
  %v75 = vpop.permute.xlu0 %74
  %78 = vset.pattern.permute.xlu0 0
  %79 = vperm.xlu0 %78, %v40
  %v80 = vpop.permute.xlu0 %79
  %83 = vset.pattern.permute.xlu0 0
  %84 = vperm.xlu0 %83, %v41
  %v85 = vpop.permute.xlu0 %84
  %88 = vset.pattern.permute.xlu0 0
  %89 = vperm.xlu0 %88, %v42
  %v90 = vpop.permute.xlu0 %89
  %93 = vset.pattern.permute.xlu0 0
  %94 = vperm.xlu0 %93, %v43
  %v95 = vpop.permute.xlu0 %94
  %vm97 = vcmask 72704
  %v99 = vsel %vm97, %v49, 0
  %v102 = vsel %vm97, %v50, 0
  %v105 = vsel %vm97, %v51, 0
  %v108 = vsel %vm97, %v52, 0
  %v111 = vsel %vm97, %v53, 0
  %v114 = vsel %vm97, %v54, 0
  %v117 = vsel %vm97, %v55, 0
  %v120 = vsel %vm97, %v56, 0
  %v123 = vsel %vm97, %v20, 0
  %v126 = vsel %vm97, %v21, 0
  %v129 = vsel %vm97, %v22, 0
  %v132 = vsel %vm97, %v23, 0
  %v135 = vsel %vm97, %v24, 0
  %v138 = vsel %vm97, %v25, 0
  %v141 = vsel %vm97, %v26, 0
  %v144 = vsel %vm97, %v27, 0
  %v147 = vsel %vm97, %v28, 0
  %v150 = vsel %vm97, %v29, 0
  %v153 = vsel %vm97, %v30, 0
  %v156 = vsel %vm97, %v31, 0
  %v159 = vsel %vm97, %v32, 0
  %v162 = vsel %vm97, %v33, 0
  %v165 = vsel %vm97, %v34, 0
  %v168 = vsel %vm97, %v35, 0
  %170 = vmatprep.subr.mxu0 0.0
  %171 = vmatpush1.xpose.msra.mxu0 %v168
  %172 = vmatprep.subr.mxu0 0.0
  %173 = vmatpush1.xpose.msra.mxu0 %v165
  %174 = vmatprep.subr.mxu0 0.0
  %175 = vmatpush1.xpose.msra.mxu0 %v162
  %176 = vmatprep.subr.mxu0 0.0
  %177 = vmatpush1.xpose.msra.mxu0 %v159
  %178 = vmatprep.subr.mxu0 0.0
  %179 = vmatpush1.xpose.msra.mxu0 %v156
  %180 = vmatprep.subr.mxu0 0.0
  %181 = vmatpush1.xpose.msra.mxu0 %v153
  %182 = vmatprep.subr.mxu0 0.0
  %183 = vmatpush1.xpose.msra.mxu0 %v150
  %184 = vmatprep.subr.mxu0 0.0
  %185 = vmatpush1.xpose.msra.mxu0 %v147
  %186 = vmatprep.subr.mxu0 0.0
  %187 = vmatpush1.xpose.msra.mxu0 %v144
  %188 = vmatprep.subr.mxu0 0.0
  %189 = vmatpush1.xpose.msra.mxu0 %v141
  %190 = vmatprep.subr.mxu0 0.0
  %191 = vmatpush1.xpose.msra.mxu0 %v138
  %192 = vmatprep.subr.mxu0 0.0
  %193 = vmatpush1.xpose.msra.mxu0 %v135
  %194 = vmatprep.subr.mxu0 0.0
  %195 = vmatpush1.xpose.msra.mxu0 %v132
  %196 = vmatprep.subr.mxu0 0.0
  %197 = vmatpush1.xpose.msra.mxu0 %v129
  %198 = vmatprep.subr.mxu0 0.0
  %199 = vmatpush1.xpose.msra.mxu0 %v126
  %200 = vmatprep.subr.mxu0 0.0
  %201 = vmatpush1.xpose.msra.mxu0 %v123
  %202 = vmatprep.subr.mxu0 0.0
  %203 = vmatpush2.xpose.msra.mxu0 0.0
  %204 = vmatprep.subr.mxu0 0.0
  %205 = vmatpush2.xpose.msra.mxu0 0.0
  %206 = vmatprep.subr.mxu0 0.0
  %207 = vmatpush2.xpose.msra.mxu0 0.0
  %208 = vmatprep.subr.mxu0 0.0
  %209 = vmatpush2.xpose.msra.mxu0 0.0
  %210 = vmatprep.subr.mxu0 0.0
  %211 = vmatpush2.xpose.msra.mxu0 0.0
  %212 = vmatprep.subr.mxu0 0.0
  %213 = vmatpush2.xpose.msra.mxu0 0.0
  %214 = vmatprep.subr.mxu0 0.0
  %215 = vmatpush2.xpose.msra.mxu0 0.0
  %216 = vmatprep.subr.mxu0 0.0
  %217 = vmatpush2.xpose.msra.mxu0 0.0
  %218 = vmatprep.subr.mxu0 0.0
  %219 = vmatpush2.xpose.msra.mxu0 0.0
  %220 = vmatprep.subr.mxu0 0.0
  %221 = vmatpush2.xpose.msra.mxu0 0.0
  %222 = vmatprep.subr.mxu0 0.0
  %223 = vmatpush2.xpose.msra.mxu0 0.0
  %224 = vmatprep.subr.mxu0 0.0
  %225 = vmatpush2.xpose.msra.mxu0 0.0
  %226 = vmatprep.subr.mxu0 0.0
  %227 = vmatpush2.xpose.msra.mxu0 0.0
  %228 = vmatprep.subr.mxu0 0.0
  %229 = vmatpush2.xpose.msra.mxu0 0.0
  %230 = vmatprep.subr.mxu0 0.0
  %231 = vmatpush2.xpose.msra.mxu0 0.0
  %232 = vmatprep.subr.mxu0 0.0
  %233 = vmatpush2.xpose.msra.mxu0 0.0
  %234 = vmatprep.mubr.f32.mxu0 0.0
  %235 = vmatmul.mubr.f32.gmra.mxu0 %v99
  %v236 = vpop.f32.mrf.mxu0
  %v237 = vadd.f32 %v60, %v236
  %v238 = vpop.f32.mrf.mxu0
  %239 = vmatprep.mubr.f32.mxu0 0.0
  %240 = vmatmul.mubr.f32.gmra.mxu0 %v102
  %v241 = vpop.f32.mrf.mxu0
  %v242 = vadd.f32 %v65, %v241
  %v243 = vpop.f32.mrf.mxu0
  %244 = vmatprep.mubr.f32.mxu0 0.0
  %245 = vmatmul.mubr.f32.gmra.mxu0 %v105
  %v246 = vpop.f32.mrf.mxu0
  %v247 = vadd.f32 %v70, %v246
  %v248 = vpop.f32.mrf.mxu0
  %249 = vmatprep.mubr.f32.mxu0 0.0
  %250 = vmatmul.mubr.f32.gmra.mxu0 %v108
  %v251 = vpop.f32.mrf.mxu0
  %v252 = vadd.f32 %v75, %v251
  %v253 = vpop.f32.mrf.mxu0
  %254 = vmatprep.mubr.f32.mxu0 0.0
  %255 = vmatmul.mubr.f32.gmra.mxu0 %v111
  %v256 = vpop.f32.mrf.mxu0
  %v257 = vadd.f32 %v80, %v256
  %v258 = vpop.f32.mrf.mxu0
  %259 = vmatprep.mubr.f32.mxu0 0.0
  %260 = vmatmul.mubr.f32.gmra.mxu0 %v114
  %v261 = vpop.f32.mrf.mxu0
  %v262 = vadd.f32 %v85, %v261
  %v263 = vpop.f32.mrf.mxu0
  %264 = vmatprep.mubr.f32.mxu0 0.0
  %265 = vmatmul.mubr.f32.gmra.mxu0 %v117
  %v266 = vpop.f32.mrf.mxu0
  %v267 = vadd.f32 %v90, %v266
  %v268 = vpop.f32.mrf.mxu0
  %269 = vmatprep.mubr.f32.mxu0 0.0
  %270 = vmatmul.mubr.f32.gmra.mxu0 %v120
  %v271 = vpop.f32.mrf.mxu0
  %v272 = vadd.f32 %v95, %v271
  %v273 = vpop.f32.mrf.mxu0
  %274 = vdwg.mxu0
  %v275 = vmax.f32 %v237, 0.0
  %v276 = vmax.f32 %v242, 0.0
  %v277 = vmax.f32 %v247, 0.0
  %v278 = vmax.f32 %v252, 0.0
  %v279 = vmax.f32 %v257, 0.0
  %v280 = vmax.f32 %v262, 0.0
  %v281 = vmax.f32 %v267, 0.0
  %v282 = vmax.f32 %v272, 0.0
  %v283 = vld [vmem:[%s2] sm:$0xff]
  %v284 = vld [vmem:[%s2 + $0x8] sm:$0xff]
  %v285 = vld [vmem:[%s2 + $0x10] sm:$0xff]
  %v286 = vld [vmem:[%s2 + $0x18] sm:$0xff]
  %288 = vset.pattern.permute.xlu0 0
  %289 = vperm.xlu0 %288, %v44
  %v290 = vpop.permute.xlu0 %289
  %293 = vset.pattern.permute.xlu0 0
  %294 = vperm.xlu0 %293, %v45
  %v295 = vpop.permute.xlu0 %294
  %298 = vset.pattern.permute.xlu0 0
  %299 = vperm.xlu0 %298, %v46
  %v300 = vpop.permute.xlu0 %299
  %303 = vset.pattern.permute.xlu0 0
  %304 = vperm.xlu0 %303, %v47
  %v305 = vpop.permute.xlu0 %304
  %vm307 = vcmask 523264
  %v309 = vsel %vm307, %v283, 0
  %v312 = vsel %vm307, %v284, 0
  %v315 = vsel %vm307, %v285, 0
  %v318 = vsel %vm307, %v286, 0
  %320 = vmatprep.subr.mxu0 0.0
  %321 = vmatpush1.msra.mxu0 0.0
  %322 = vmatprep.subr.mxu0 0.0
  %323 = vmatpush1.msra.mxu0 0.0
  %324 = vmatprep.subr.mxu0 0.0
  %325 = vmatpush1.msra.mxu0 0.0
  %326 = vmatprep.subr.mxu0 0.0
  %327 = vmatpush1.msra.mxu0 0.0
  %328 = vmatprep.subr.mxu0 0.0
  %329 = vmatpush1.msra.mxu0 0.0
  %330 = vmatprep.subr.mxu0 0.0
  %331 = vmatpush1.msra.mxu0 0.0
  %332 = vmatprep.subr.mxu0 0.0
  %333 = vmatpush1.msra.mxu0 0.0
  %334 = vmatprep.subr.mxu0 0.0
  %335 = vmatpush1.msra.mxu0 0.0
  %336 = vmatprep.subr.mxu0 0.0
  %337 = vmatpush1.msra.mxu0 %v282
  %338 = vmatprep.subr.mxu0 0.0
  %339 = vmatpush1.msra.mxu0 %v281
  %340 = vmatprep.subr.mxu0 0.0
  %341 = vmatpush1.msra.mxu0 %v280
  %342 = vmatprep.subr.mxu0 0.0
  %343 = vmatpush1.msra.mxu0 %v279
  %344 = vmatprep.subr.mxu0 0.0
  %345 = vmatpush1.msra.mxu0 %v278
  %346 = vmatprep.subr.mxu0 0.0
  %347 = vmatpush1.msra.mxu0 %v277
  %348 = vmatprep.subr.mxu0 0.0
  %349 = vmatpush1.msra.mxu0 %v276
  %350 = vmatprep.subr.mxu0 0.0
  %351 = vmatpush1.msra.mxu0 %v275
  %352 = vmatprep.subr.mxu0 0.0
  %353 = vmatpush2.msra.mxu0 0.0
  %354 = vmatprep.subr.mxu0 0.0
  %355 = vmatpush2.msra.mxu0 0.0
  %356 = vmatprep.subr.mxu0 0.0
  %357 = vmatpush2.msra.mxu0 0.0
  %358 = vmatprep.subr.mxu0 0.0
  %359 = vmatpush2.msra.mxu0 0.0
  %360 = vmatprep.subr.mxu0 0.0
  %361 = vmatpush2.msra.mxu0 0.0
  %362 = vmatprep.subr.mxu0 0.0
  %363 = vmatpush2.msra.mxu0 0.0
  %364 = vmatprep.subr.mxu0 0.0
  %365 = vmatpush2.msra.mxu0 0.0
  %366 = vmatprep.subr.mxu0 0.0
  %367 = vmatpush2.msra.mxu0 0.0
  %368 = vmatprep.subr.mxu0 0.0
  %369 = vmatpush2.msra.mxu0 0.0
  %370 = vmatprep.subr.mxu0 0.0
  %371 = vmatpush2.msra.mxu0 0.0
  %372 = vmatprep.subr.mxu0 0.0
  %373 = vmatpush2.msra.mxu0 0.0
  %374 = vmatprep.subr.mxu0 0.0
  %375 = vmatpush2.msra.mxu0 0.0
  %376 = vmatprep.subr.mxu0 0.0
  %377 = vmatpush2.msra.mxu0 0.0
  %378 = vmatprep.subr.mxu0 0.0
  %379 = vmatpush2.msra.mxu0 0.0
  %380 = vmatprep.subr.mxu0 0.0
  %381 = vmatpush2.msra.mxu0 0.0
  %382 = vmatprep.subr.mxu0 0.0
  %383 = vmatpush2.msra.mxu0 0.0
  %384 = vmatprep.mubr.f32.mxu0 0.0
  %385 = vmatmul.mubr.f32.gmra.mxu0 %v309
  %v386 = vpop.f32.mrf.mxu0
  %v387 = vadd.f32 %v290, %v386
  %v388 = vpop.f32.mrf.mxu0
  %389 = vmatprep.mubr.f32.mxu0 0.0
  %390 = vmatmul.mubr.f32.gmra.mxu0 %v312
  %v391 = vpop.f32.mrf.mxu0
  %v392 = vadd.f32 %v295, %v391
  %v393 = vpop.f32.mrf.mxu0
  %394 = vmatprep.mubr.f32.mxu0 0.0
  %395 = vmatmul.mubr.f32.gmra.mxu0 %v315
  %v396 = vpop.f32.mrf.mxu0
  %v397 = vadd.f32 %v300, %v396
  %v398 = vpop.f32.mrf.mxu0
  %399 = vmatprep.mubr.f32.mxu0 0.0
  %400 = vmatmul.mubr.f32.gmra.mxu0 %v318
  %v401 = vpop.f32.mrf.mxu0
  %v402 = vadd.f32 %v305, %v401
  %v403 = vpop.f32.mrf.mxu0
  %404 = vdwg.mxu0
  %v405 = vmax.f32 %v387, 0.0
  %v406 = vmax.f32 %v392, 0.0
  %v407 = vmax.f32 %v397, 0.0
  %v408 = vmax.f32 %v402, 0.0
  %v409 = vld [vmem:[%s3] sm:$0x1]
  %411 = vset.pattern.permute.xlu0 0
  %412 = vperm.xlu0 %411, %v48
  %v413 = vpop.permute.xlu0 %412
  %vm415 = vcmask 261120
  %v417 = vsel %vm415, %v409, 0
  %419 = vmatprep.subr.mxu0 0.0
  %420 = vmatpush1.msra.mxu0 0.0
  %421 = vmatprep.subr.mxu0 0.0
  %422 = vmatpush1.msra.mxu0 0.0
  %423 = vmatprep.subr.mxu0 0.0
  %424 = vmatpush1.msra.mxu0 0.0
  %425 = vmatprep.subr.mxu0 0.0
  %426 = vmatpush1.msra.mxu0 0.0
  %427 = vmatprep.subr.mxu0 0.0
  %428 = vmatpush1.msra.mxu0 0.0
  %429 = vmatprep.subr.mxu0 0.0
  %430 = vmatpush1.msra.mxu0 0.0
  %431 = vmatprep.subr.mxu0 0.0
  %432 = vmatpush1.msra.mxu0 0.0
  %433 = vmatprep.subr.mxu0 0.0
  %434 = vmatpush1.msra.mxu0 0.0
  %435 = vmatprep.subr.mxu0 0.0
  %436 = vmatpush1.msra.mxu0 0.0
  %437 = vmatprep.subr.mxu0 0.0
  %438 = vmatpush1.msra.mxu0 0.0
  %439 = vmatprep.subr.mxu0 0.0
  %440 = vmatpush1.msra.mxu0 0.0
  %441 = vmatprep.subr.mxu0 0.0
  %442 = vmatpush1.msra.mxu0 0.0
  %443 = vmatprep.subr.mxu0 0.0
  %444 = vmatpush1.msra.mxu0 %v408
  %445 = vmatprep.subr.mxu0 0.0
  %446 = vmatpush1.msra.mxu0 %v407
  %447 = vmatprep.subr.mxu0 0.0
  %448 = vmatpush1.msra.mxu0 %v406
  %449 = vmatprep.subr.mxu0 0.0
  %450 = vmatpush1.msra.mxu0 %v405
  %451 = vmatprep.subr.mxu0 0.0
  %452 = vmatpush2.msra.mxu0 0.0
  %453 = vmatprep.subr.mxu0 0.0
  %454 = vmatpush2.msra.mxu0 0.0
  %455 = vmatprep.subr.mxu0 0.0
  %456 = vmatpush2.msra.mxu0 0.0
  %457 = vmatprep.subr.mxu0 0.0
  %458 = vmatpush2.msra.mxu0 0.0
  %459 = vmatprep.subr.mxu0 0.0
  %460 = vmatpush2.msra.mxu0 0.0
  %461 = vmatprep.subr.mxu0 0.0
  %462 = vmatpush2.msra.mxu0 0.0
  %463 = vmatprep.subr.mxu0 0.0
  %464 = vmatpush2.msra.mxu0 0.0
  %465 = vmatprep.subr.mxu0 0.0
  %466 = vmatpush2.msra.mxu0 0.0
  %467 = vmatprep.subr.mxu0 0.0
  %468 = vmatpush2.msra.mxu0 0.0
  %469 = vmatprep.subr.mxu0 0.0
  %470 = vmatpush2.msra.mxu0 0.0
  %471 = vmatprep.subr.mxu0 0.0
  %472 = vmatpush2.msra.mxu0 0.0
  %473 = vmatprep.subr.mxu0 0.0
  %474 = vmatpush2.msra.mxu0 0.0
  %475 = vmatprep.subr.mxu0 0.0
  %476 = vmatpush2.msra.mxu0 0.0
  %477 = vmatprep.subr.mxu0 0.0
  %478 = vmatpush2.msra.mxu0 0.0
  %479 = vmatprep.subr.mxu0 0.0
  %480 = vmatpush2.msra.mxu0 0.0
  %481 = vmatprep.subr.mxu0 0.0
  %482 = vmatpush2.msra.mxu0 0.0
  %483 = vmatprep.mubr.f32.mxu0 0.0
  %484 = vmatmul.mubr.f32.gmra.mxu0 %v417
  %v485 = vpop.f32.mrf.mxu0
  %v486 = vadd.f32 %v413, %v485
  %v487 = vpop.f32.mrf.mxu0
  %488 = vdwg.mxu0
  %489 = vst [vmem:[%s5] sm:$0x1] %v486
  // Predicated region
  $region22: #{diamond_price_predictor.1} parent=0 // pred_check
    _
  $region23: #{diamond_price_predictor.1} parent=0 // pred_check_branch
    %491 = sbr.rel (0) target = $region25
  $region24: #{diamond_price_predictor.1} parent=0 // pred_region
    _
  $region25: #{diamond_price_predictor.1} parent=0 // pred_fallthru
    _
  // Predicated region
  $region26: #{diamond_price_predictor.1} parent=0 // pred_check
    _
  $region27: #{diamond_price_predictor.1} parent=0 // pred_check_branch
    %493 = sbr.rel (0) target = $region29
  $region28: #{diamond_price_predictor.1} parent=0 // pred_region
    _
  $region29: #{diamond_price_predictor.1} parent=0 // pred_fallthru
    _

</llo_original>
